<compile_context>
chip_gen: v6e
topology: v6e:2x2x1
jax: 0.10.0
libtpu: 0.0.40
codegen_flags: <defaults>
</compile_context>

<pallas_src>
import functools

import numpy as np

import jax
import jax.numpy as jnp
from jax.experimental import pallas as pl
from jax.experimental.pallas import tpu as pltpu


def _sigmoid(v):
    # Exactly sigmoid(x) = 0.5 * (1 + tanh(x / 2)): a single EUP op.
    return 0.5 * jnp.tanh(0.5 * v) + 0.5


def _pad_to(v, m):
    return -(-v // m) * m


def yolo_kernel(grid_ref, pred_ref, out_ref, *, anchors_px, num_classes, stride):
    # grid_ref: (2, GG)      [gx; gy] flattened-cell offsets (lane-dense)
    # pred_ref: (A, CC, GG)  raw predictions, channel-major, cells in lanes
    # out_ref:  (A*GG, CC)   decoded output in the final reference layout
    A, CC, GG = pred_ref.shape
    assert CC == num_classes + 5
    CCP = _pad_to(CC, 8)          # pad channels to a sublane multiple (native tile)
    dtype = pred_ref.dtype

    p = pred_ref[...]             # one full-tile (unmasked) load
    grid_xy = grid_ref[...]       # (2, GG)

    cols = []
    for a in range(A):            # static unroll; A is tiny (3)
        aw, ah = anchors_px[a]    # anchors in pixels (the /stride * stride cancels)
        pa = p[a]                 # (CC, GG) register slice
        xy = (_sigmoid(pa[0:2, :]) + grid_xy) * stride     # box center, pixels
        wh = jnp.exp(pa[2:4, :])
        w = wh[0:1, :] * aw                                 # box size, pixels
        h = wh[1:2, :] * ah
        rest = _sigmoid(pa[4:CC, :])                        # objectness + classes
        pieces = [xy, w, h, rest]
        if CCP > CC:
            pieces.append(jnp.zeros((CCP - CC, GG), dtype))
        cols.append(jnp.concatenate(pieces, axis=0))        # (CCP, GG)

    slab = jnp.concatenate(cols, axis=1)     # (CCP, A*GG) native (8, k*128) tile
    slab_t = jnp.transpose(slab, (1, 0))     # (A*GG, CCP) single in-register transpose
    out_ref[...] = slab_t[:, :CC].astype(out_ref.dtype)     # one full-tile store


def yolo_layer(x, anchors, num_classes, img_dim):
    """x: (N, A*(C+5), G, G) float32; anchors: (A, 2) in pixels (static config).
    Returns (output, 0) with output of shape (N, A*G*G, C+5)."""
    N, ch, G, _ = x.shape
    anchors_px = tuple((float(w), float(h)) for w, h in np.asarray(anchors))
    A = len(anchors_px)
    C = int(num_classes)
    CC = C + 5
    assert ch == A * CC
    GG = G * G
    stride = float(img_dim) / float(G)

    # Free contiguous reshape -- no pre-kernel transpose pass over HBM.
    pred = x.reshape(N, A, CC, GG)

    # Lane-dense (2, GG) grid offsets, computed once on host.
    r = np.arange(GG)
    grid_xy = jnp.asarray(np.stack([r % G, r // G]).astype(np.float32)).astype(x.dtype)

    kernel = functools.partial(
        yolo_kernel, anchors_px=anchors_px, num_classes=C, stride=stride)

    # VMEM budget from actual (padded) double-buffered block sizes, with
    # headroom for relayout scratch; capped below v7x's 64 MiB physical VMEM.
    itemsize = jnp.dtype(x.dtype).itemsize
    lanes = _pad_to(GG, 128)
    in_bytes = A * _pad_to(CC, 8) * lanes * itemsize
    grid_bytes = 8 * lanes * itemsize
    out_bytes = _pad_to(A * GG, 8) * _pad_to(CC, 128) * itemsize
    needed = 2 * (in_bytes + grid_bytes + out_bytes) + (4 << 20)
    vmem_limit = int(min(max(needed, 32 << 20), 48 << 20))

    out = pl.pallas_call(
        kernel,
        out_shape=jax.ShapeDtypeStruct((N, A * GG, CC), x.dtype),
        grid=(N,),
        in_specs=[
            pl.BlockSpec((2, GG), lambda n: (0, 0)),
            pl.BlockSpec((None, A, CC, GG), lambda n: (n, 0, 0, 0)),
        ],
        out_specs=pl.BlockSpec((None, A * GG, CC), lambda n: (n, 0, 0)),
        compiler_params=pltpu.CompilerParams(
            dimension_semantics=("parallel",),
            vmem_limit_bytes=vmem_limit),
    )(grid_xy, pred)

    # TODO(synk): training branch (build_targets + MSE/BCE losses + metrics)
    # not implemented; inference path returns loss placeholder 0 as in PyTorch.
    return out, 0


def yolo_ref(x, anchors, num_classes, img_dim):
    """Pure-JAX reference mirroring the PyTorch forward exactly."""
    N, ch, G, _ = x.shape
    A = anchors.shape[0]
    C = num_classes
    stride = float(img_dim) / float(G)
    pred = x.reshape(N, A, C + 5, G, G).transpose(0, 1, 3, 4, 2)
    xs = jax.nn.sigmoid(pred[..., 0])
    ys = jax.nn.sigmoid(pred[..., 1])
    w = pred[..., 2]
    h = pred[..., 3]
    conf = jax.nn.sigmoid(pred[..., 4])
    cls = jax.nn.sigmoid(pred[..., 5:])
    gx = jnp.arange(G, dtype=x.dtype).reshape(1, 1, 1, G)
    gy = jnp.arange(G, dtype=x.dtype).reshape(1, 1, G, 1)
    aw = (anchors[:, 0] / stride).reshape(1, A, 1, 1)
    ah = (anchors[:, 1] / stride).reshape(1, A, 1, 1)
    boxes = jnp.stack([xs + gx, ys + gy, jnp.exp(w) * aw, jnp.exp(h) * ah], -1)
    out = jnp.concatenate(
        [boxes.reshape(N, -1, 4) * stride,
         conf.reshape(N, -1, 1),
         cls.reshape(N, -1, C)], -1)
    return out


if __name__ == "__main__":
    # Deterministic small config: N=2, A=3 anchors, C=2 classes, G=16, img_dim=416.
    key = jax.random.PRNGKey(0)
    N, A, C, G = 2, 3, 2, 16
    img_dim = 416
    anchors = jnp.array([[10., 13.], [16., 30.], [33., 23.]], dtype=jnp.float32)

    x = jax.random.normal(key, (N, A * (C + 5), G, G), dtype=jnp.float32)

    out, loss = yolo_layer(x, anchors, C, img_dim)
    out = jax.block_until_ready(out)

    ref = yolo_ref(x, anchors, C, img_dim)
    assert out.shape == (N, A * G * G, C + 5), out.shape
    assert jnp.allclose(out, ref, rtol=1e-5, atol=1e-4), (
        float(jnp.max(jnp.abs(out - ref))))
    assert loss == 0

    print("KERNEL_OK")
</pallas_src>

<mosaic_0001>
module attributes {stable_mosaic.version = 11 : i64} {
  func.func @yolo_kernel(%arg0: i32, %arg1: memref<2x256xf32, #tpu.memory_space<vmem>>, %arg2: memref<1x3x7x256xf32, #tpu.memory_space<vmem>>, %arg3: memref<1x768x7xf32, #tpu.memory_space<vmem>>) attributes {dimension_semantics = [#tpu.dimension_semantics<parallel>], iteration_bounds = array<i64: 2>, scalar_prefetch = 0 : i64, scratch_operands = 0 : i64, tpu.core_type = #tpu.core_type<tc>, window_params = [{pipeline_mode = #tpu.pipeline_mode<synchronous>, transform_indices = @transform_0, window_bounds = array<i64: 2, 256>}, {transform_indices = @transform_1, window_bounds = array<i64: 1, 3, 7, 256>}, {transform_indices = @transform_2, window_bounds = array<i64: 1, 768, 7>}]} {
    %c0 = arith.constant 0 : index
    %c0_0 = arith.constant 0 : index
    %c0_1 = arith.constant 0 : index
    %c0_2 = arith.constant 0 : index
    %0 = vector.load %arg2[%c0, %c0_0, %c0_1, %c0_2] : memref<1x3x7x256xf32, #tpu.memory_space<vmem>>, vector<1x3x7x256xf32>
    %1 = vector.shape_cast %0 : vector<1x3x7x256xf32> to vector<3x7x256xf32>
    %c0_3 = arith.constant 0 : index
    %c0_4 = arith.constant 0 : index
    %2 = vector.load %arg1[%c0_3, %c0_4] : memref<2x256xf32, #tpu.memory_space<vmem>>, vector<2x256xf32>
    %3 = vector.extract_strided_slice %1 {offsets = [0, 0, 0], sizes = [1, 7, 256], strides = [1, 1, 1]} : vector<3x7x256xf32> to vector<1x7x256xf32>
    %4 = vector.shape_cast %3 : vector<1x7x256xf32> to vector<7x256xf32>
    %5 = vector.extract_strided_slice %4 {offsets = [0, 0], sizes = [2, 256], strides = [1, 1]} : vector<7x256xf32> to vector<2x256xf32>
    %cst = arith.constant 5.000000e-01 : f32
    %6 = vector.broadcast %cst : f32 to vector<2x256xf32>
    %7 = arith.mulf %6, %5 : vector<2x256xf32>
    %8 = math.tanh %7 : vector<2x256xf32>
    %cst_5 = arith.constant 5.000000e-01 : f32
    %9 = vector.broadcast %cst_5 : f32 to vector<2x256xf32>
    %10 = arith.mulf %9, %8 : vector<2x256xf32>
    %cst_6 = arith.constant 5.000000e-01 : f32
    %11 = vector.broadcast %cst_6 : f32 to vector<2x256xf32>
    %12 = arith.addf %10, %11 : vector<2x256xf32>
    %13 = arith.addf %12, %2 : vector<2x256xf32>
    %cst_7 = arith.constant 2.600000e+01 : f32
    %14 = vector.broadcast %cst_7 : f32 to vector<2x256xf32>
    %15 = arith.mulf %13, %14 : vector<2x256xf32>
    %16 = vector.extract_strided_slice %4 {offsets = [2, 0], sizes = [2, 256], strides = [1, 1]} : vector<7x256xf32> to vector<2x256xf32>
    %17 = math.exp %16 : vector<2x256xf32>
    %18 = vector.extract_strided_slice %17 {offsets = [0, 0], sizes = [1, 256], strides = [1, 1]} : vector<2x256xf32> to vector<1x256xf32>
    %cst_8 = arith.constant 1.000000e+01 : f32
    %19 = vector.broadcast %cst_8 : f32 to vector<1x256xf32>
    %20 = arith.mulf %18, %19 : vector<1x256xf32>
    %21 = vector.extract_strided_slice %17 {offsets = [1, 0], sizes = [1, 256], strides = [1, 1]} : vector<2x256xf32> to vector<1x256xf32>
    %cst_9 = arith.constant 1.300000e+01 : f32
    %22 = vector.broadcast %cst_9 : f32 to vector<1x256xf32>
    %23 = arith.mulf %21, %22 : vector<1x256xf32>
    %24 = vector.extract_strided_slice %4 {offsets = [4, 0], sizes = [3, 256], strides = [1, 1]} : vector<7x256xf32> to vector<3x256xf32>
    %cst_10 = arith.constant 5.000000e-01 : f32
    %25 = vector.broadcast %cst_10 : f32 to vector<3x256xf32>
    %26 = arith.mulf %25, %24 : vector<3x256xf32>
    %27 = math.tanh %26 : vector<3x256xf32>
    %cst_11 = arith.constant 5.000000e-01 : f32
    %28 = vector.broadcast %cst_11 : f32 to vector<3x256xf32>
    %29 = arith.mulf %28, %27 : vector<3x256xf32>
    %cst_12 = arith.constant 5.000000e-01 : f32
    %30 = vector.broadcast %cst_12 : f32 to vector<3x256xf32>
    %31 = arith.addf %29, %30 : vector<3x256xf32>
    %cst_13 = arith.constant 0.000000e+00 : f32
    %32 = vector.broadcast %cst_13 : f32 to vector<1x256xf32>
    %33 = tpu.concatenate %15, %20, %23, %31, %32 in 0 : vector<2x256xf32>, vector<1x256xf32>, vector<1x256xf32>, vector<3x256xf32>, vector<1x256xf32> -> vector<8x256xf32>
    %34 = vector.extract_strided_slice %1 {offsets = [1, 0, 0], sizes = [1, 7, 256], strides = [1, 1, 1]} : vector<3x7x256xf32> to vector<1x7x256xf32>
    %35 = vector.shape_cast %34 : vector<1x7x256xf32> to vector<7x256xf32>
    %36 = vector.extract_strided_slice %35 {offsets = [0, 0], sizes = [2, 256], strides = [1, 1]} : vector<7x256xf32> to vector<2x256xf32>
    %cst_14 = arith.constant 5.000000e-01 : f32
    %37 = vector.broadcast %cst_14 : f32 to vector<2x256xf32>
    %38 = arith.mulf %37, %36 : vector<2x256xf32>
    %39 = math.tanh %38 : vector<2x256xf32>
    %cst_15 = arith.constant 5.000000e-01 : f32
    %40 = vector.broadcast %cst_15 : f32 to vector<2x256xf32>
    %41 = arith.mulf %40, %39 : vector<2x256xf32>
    %cst_16 = arith.constant 5.000000e-01 : f32
    %42 = vector.broadcast %cst_16 : f32 to vector<2x256xf32>
    %43 = arith.addf %41, %42 : vector<2x256xf32>
    %44 = arith.addf %43, %2 : vector<2x256xf32>
    %cst_17 = arith.constant 2.600000e+01 : f32
    %45 = vector.broadcast %cst_17 : f32 to vector<2x256xf32>
    %46 = arith.mulf %44, %45 : vector<2x256xf32>
    %47 = vector.extract_strided_slice %35 {offsets = [2, 0], sizes = [2, 256], strides = [1, 1]} : vector<7x256xf32> to vector<2x256xf32>
    %48 = math.exp %47 : vector<2x256xf32>
    %49 = vector.extract_strided_slice %48 {offsets = [0, 0], sizes = [1, 256], strides = [1, 1]} : vector<2x256xf32> to vector<1x256xf32>
    %cst_18 = arith.constant 1.600000e+01 : f32
    %50 = vector.broadcast %cst_18 : f32 to vector<1x256xf32>
    %51 = arith.mulf %49, %50 : vector<1x256xf32>
    %52 = vector.extract_strided_slice %48 {offsets = [1, 0], sizes = [1, 256], strides = [1, 1]} : vector<2x256xf32> to vector<1x256xf32>
    %cst_19 = arith.constant 3.000000e+01 : f32
    %53 = vector.broadcast %cst_19 : f32 to vector<1x256xf32>
    %54 = arith.mulf %52, %53 : vector<1x256xf32>
    %55 = vector.extract_strided_slice %35 {offsets = [4, 0], sizes = [3, 256], strides = [1, 1]} : vector<7x256xf32> to vector<3x256xf32>
    %cst_20 = arith.constant 5.000000e-01 : f32
    %56 = vector.broadcast %cst_20 : f32 to vector<3x256xf32>
    %57 = arith.mulf %56, %55 : vector<3x256xf32>
    %58 = math.tanh %57 : vector<3x256xf32>
    %cst_21 = arith.constant 5.000000e-01 : f32
    %59 = vector.broadcast %cst_21 : f32 to vector<3x256xf32>
    %60 = arith.mulf %59, %58 : vector<3x256xf32>
    %cst_22 = arith.constant 5.000000e-01 : f32
    %61 = vector.broadcast %cst_22 : f32 to vector<3x256xf32>
    %62 = arith.addf %60, %61 : vector<3x256xf32>
    %cst_23 = arith.constant 0.000000e+00 : f32
    %63 = vector.broadcast %cst_23 : f32 to vector<1x256xf32>
    %64 = tpu.concatenate %46, %51, %54, %62, %63 in 0 : vector<2x256xf32>, vector<1x256xf32>, vector<1x256xf32>, vector<3x256xf32>, vector<1x256xf32> -> vector<8x256xf32>
    %65 = vector.extract_strided_slice %1 {offsets = [2, 0, 0], sizes = [1, 7, 256], strides = [1, 1, 1]} : vector<3x7x256xf32> to vector<1x7x256xf32>
    %66 = vector.shape_cast %65 : vector<1x7x256xf32> to vector<7x256xf32>
    %67 = vector.extract_strided_slice %66 {offsets = [0, 0], sizes = [2, 256], strides = [1, 1]} : vector<7x256xf32> to vector<2x256xf32>
    %cst_24 = arith.constant 5.000000e-01 : f32
    %68 = vector.broadcast %cst_24 : f32 to vector<2x256xf32>
    %69 = arith.mulf %68, %67 : vector<2x256xf32>
    %70 = math.tanh %69 : vector<2x256xf32>
    %cst_25 = arith.constant 5.000000e-01 : f32
    %71 = vector.broadcast %cst_25 : f32 to vector<2x256xf32>
    %72 = arith.mulf %71, %70 : vector<2x256xf32>
    %cst_26 = arith.constant 5.000000e-01 : f32
    %73 = vector.broadcast %cst_26 : f32 to vector<2x256xf32>
    %74 = arith.addf %72, %73 : vector<2x256xf32>
    %75 = arith.addf %74, %2 : vector<2x256xf32>
    %cst_27 = arith.constant 2.600000e+01 : f32
    %76 = vector.broadcast %cst_27 : f32 to vector<2x256xf32>
    %77 = arith.mulf %75, %76 : vector<2x256xf32>
    %78 = vector.extract_strided_slice %66 {offsets = [2, 0], sizes = [2, 256], strides = [1, 1]} : vector<7x256xf32> to vector<2x256xf32>
    %79 = math.exp %78 : vector<2x256xf32>
    %80 = vector.extract_strided_slice %79 {offsets = [0, 0], sizes = [1, 256], strides = [1, 1]} : vector<2x256xf32> to vector<1x256xf32>
    %cst_28 = arith.constant 3.300000e+01 : f32
    %81 = vector.broadcast %cst_28 : f32 to vector<1x256xf32>
    %82 = arith.mulf %80, %81 : vector<1x256xf32>
    %83 = vector.extract_strided_slice %79 {offsets = [1, 0], sizes = [1, 256], strides = [1, 1]} : vector<2x256xf32> to vector<1x256xf32>
    %cst_29 = arith.constant 2.300000e+01 : f32
    %84 = vector.broadcast %cst_29 : f32 to vector<1x256xf32>
    %85 = arith.mulf %83, %84 : vector<1x256xf32>
    %86 = vector.extract_strided_slice %66 {offsets = [4, 0], sizes = [3, 256], strides = [1, 1]} : vector<7x256xf32> to vector<3x256xf32>
    %cst_30 = arith.constant 5.000000e-01 : f32
    %87 = vector.broadcast %cst_30 : f32 to vector<3x256xf32>
    %88 = arith.mulf %87, %86 : vector<3x256xf32>
    %89 = math.tanh %88 : vector<3x256xf32>
    %cst_31 = arith.constant 5.000000e-01 : f32
    %90 = vector.broadcast %cst_31 : f32 to vector<3x256xf32>
    %91 = arith.mulf %90, %89 : vector<3x256xf32>
    %cst_32 = arith.constant 5.000000e-01 : f32
    %92 = vector.broadcast %cst_32 : f32 to vector<3x256xf32>
    %93 = arith.addf %91, %92 : vector<3x256xf32>
    %cst_33 = arith.constant 0.000000e+00 : f32
    %94 = vector.broadcast %cst_33 : f32 to vector<1x256xf32>
    %95 = tpu.concatenate %77, %82, %85, %93, %94 in 0 : vector<2x256xf32>, vector<1x256xf32>, vector<1x256xf32>, vector<3x256xf32>, vector<1x256xf32> -> vector<8x256xf32>
    %96 = tpu.concatenate %33, %64, %95 in 1 : vector<8x256xf32>, vector<8x256xf32>, vector<8x256xf32> -> vector<8x768xf32>
    %97 = tpu.transpose %96, [1, 0] : vector<8x768xf32> -> vector<768x8xf32>
    %98 = vector.extract_strided_slice %97 {offsets = [0, 0], sizes = [768, 7], strides = [1, 1]} : vector<768x8xf32> to vector<768x7xf32>
    %c0_34 = arith.constant 0 : index
    %c0_35 = arith.constant 0 : index
    %c0_36 = arith.constant 0 : index
    %99 = vector.load %arg3[%c0_34, %c0_35, %c0_36] : memref<1x768x7xf32, #tpu.memory_space<vmem>>, vector<1x768x7xf32>
    %100 = vector.shape_cast %99 : vector<1x768x7xf32> to vector<768x7xf32>
    %101 = vector.shape_cast %98 : vector<768x7xf32> to vector<1x768x7xf32>
    tpu.vector_store %arg3[%c0_34, %c0_35, %c0_36], %101 {strides = array<i32>} : memref<1x768x7xf32, #tpu.memory_space<vmem>>, vector<1x768x7xf32>,
    return
  }
  func.func @transform_0(%arg0: i32) -> (i32, i32) {
    %c0_i32 = arith.constant 0 : i32
    %c0_i32_0 = arith.constant 0 : i32
    %c0_i32_1 = arith.constant 0 : i32
    return %c0_i32, %c0_i32_0 : i32, i32
  }
  func.func @transform_1(%arg0: i32) -> (i32, i32, i32, i32) {
    %c0_i32 = arith.constant 0 : i32
    %c0_i32_0 = arith.constant 0 : i32
    %c0_i32_1 = arith.constant 0 : i32
    %c0_i32_2 = arith.constant 0 : i32
    return %arg0, %c0_i32, %c0_i32_0, %c0_i32_1 : i32, i32, i32, i32
  }
  func.func @transform_2(%arg0: i32) -> (i32, i32, i32) {
    %c0_i32 = arith.constant 0 : i32
    %c0_i32_0 = arith.constant 0 : i32
    %c0_i32_1 = arith.constant 0 : i32
    return %arg0, %c0_i32, %c0_i32_0 : i32, i32, i32
  }
}

</mosaic_0001>

<llo_original>
// kernel: tpu_custom_call.1
$region0: #{tpu_custom_call.1}
  #allocation0 [shape = 'u32[]', space=smem, size = 0x4, offset = 0x4, fixed_abs, tag = 'smem constant byte address 0x4 - core index']
  #allocation1 [shape = 'u32[144,128]{1,0:T(1,128)}', space=vmem, size = 0x12000, scoped, tag = 'internal scratch']
  %s0 = inlined_call_operand.vmem [shape: f32[2,256], index: 0, kind: input, shape index: {}]
  %s1 = inlined_call_operand.vmem [shape: f32[2,3,7,256], index: 1, kind: input, shape index: {}]
  %s2 = inlined_call_operand.vmem [shape: f32[2,768,7], index: 2, kind: output, shape index: {}]
  %s3 = sld [smem:[#allocation0]]
  $region41: #{tpu_custom_call.1} parent=0
    _
  %s5 = ssub.s32 1, %s3
  %s6 = scalar_select 0, %s5, %s3
  loop: start=0, step=1, limit=4
  $region2: #{tpu_custom_call.1} parent=0 // loop_pre_header
    _
  $region3: #{tpu_custom_call.1} parent=0 // loop_header
    %s8 = sphi 0, %s12
    %p9 = scmp.ge.s32.totalorder %s8, 4
    %s16 = sphi 0, %s16
    %s18 = sphi 0, %s16
    %s19 = sphi 0, %s18
    %s33 = sphi 0, %s19
    %s39 = sphi 0, %s41
    %s42 = sphi 0, %s39
    %s43 = sphi 0, %s42
    %s59 = sphi 0, %s43
    %s65 = sphi 0, %s67
    %s68 = sphi 0, %s65
    %s69 = sphi 0, %s68
    %s85 = sphi 0, %s69
  $region4: #{tpu_custom_call.1} parent=0 // loop_header_branch
    %11 = sbr.rel (%p9) target = $region8
  $region5: #{tpu_custom_call.1} parent=0 // loop_body
    %s13 = ssub.s32 %s8, 1
    %s14 = ssub.s32 %s8, 2
    %s15 = sadd.s32 %s8, 1
    %s17 = sadd.s32 %s16, 1
    %p20 = scmp.eq.s32.totalorder %s8, 1
    %p21 = scmp.ne.s32.totalorder %s16, %s18
    %p22 = scmp.eq.s32.totalorder %s8, 0
    %p23 = por %p21, %p22
    %p24 = scmp.ne.s32.totalorder %s16, %s18
    %p25 = scmp.eq.s32.totalorder %s13, 1
    %p26 = por %p24, %p25
    %p27 = scmp.ne.s32.totalorder %s18, %s19
    %p28 = scmp.eq.s32.totalorder %s13, 0
    %p29 = por %p27, %p28
    %p30 = scmp.ne.s32.totalorder %s18, %s19
    %p31 = scmp.eq.s32.totalorder %s14, 1
    %p32 = por %p30, %p31
    %p34 = scmp.ne.s32.totalorder %s19, %s33
    %p35 = scmp.eq.s32.totalorder %s14, 0
    %p36 = por %p34, %p35
    %s37 = ssub.s32 %s8, %s15
    %p38 = scmp.eq.s32.totalorder %s37, 0
    %s40 = sadd.s32 %s39, 1
    %s41 = scalar_select %p38, %s39, %s40
    %p44 = pneg %p38
    %p45 = scmp.eq.s32.totalorder %s8, 1
    %p46 = por %p44, %p45
    %p47 = scmp.ne.s32.totalorder %s39, %s42
    %p48 = scmp.eq.s32.totalorder %s8, 0
    %p49 = por %p47, %p48
    %p50 = scmp.ne.s32.totalorder %s39, %s42
    %p51 = scmp.eq.s32.totalorder %s13, 1
    %p52 = por %p50, %p51
    %p53 = scmp.ne.s32.totalorder %s42, %s43
    %p54 = scmp.eq.s32.totalorder %s13, 0
    %p55 = por %p53, %p54
    %p56 = scmp.ne.s32.totalorder %s42, %s43
    %p57 = scmp.eq.s32.totalorder %s14, 1
    %p58 = por %p56, %p57
    %p60 = scmp.ne.s32.totalorder %s43, %s59
    %p61 = scmp.eq.s32.totalorder %s14, 0
    %p62 = por %p60, %p61
    %s63 = ssub.s32 %s8, %s15
    %p64 = scmp.eq.s32.totalorder %s63, 0
    %s66 = sadd.s32 %s65, 1
    %s67 = scalar_select %p64, %s65, %s66
    %p70 = pneg %p64
    %p71 = scmp.eq.s32.totalorder %s8, 1
    %p72 = por %p70, %p71
    %p73 = scmp.ne.s32.totalorder %s65, %s68
    %p74 = scmp.eq.s32.totalorder %s8, 0
    %p75 = por %p73, %p74
    %p76 = scmp.ne.s32.totalorder %s65, %s68
    %p77 = scmp.eq.s32.totalorder %s13, 1
    %p78 = por %p76, %p77
    %p79 = scmp.ne.s32.totalorder %s68, %s69
    %p80 = scmp.eq.s32.totalorder %s13, 0
    %p81 = por %p79, %p80
    %p82 = scmp.ne.s32.totalorder %s68, %s69
    %p83 = scmp.eq.s32.totalorder %s14, 1
    %p84 = por %p82, %p83
    %p86 = scmp.ne.s32.totalorder %s69, %s85
    %p87 = scmp.eq.s32.totalorder %s14, 0
    %p88 = por %p86, %p87
    %p89 = scmp.le.s32.totalorder 1, %s8
    %p90 = scmp.lt.s32.totalorder %s8, 3
    %p91 = pnand %p89, %p90
    %p92 = pneg %p91
    // Predicated region
    $region9: #{tpu_custom_call.1} parent=5 // pred_check
      _
    $region10: #{tpu_custom_call.1} parent=5 // pred_check_branch
      %94 = sbr.rel (%p91) target = $region12
    $region11: #{tpu_custom_call.1} parent=5 // pred_region
      %s95 = ssub.s32 %s8, 1
      // Predicated region
      $region13: #{tpu_custom_call.1} parent=11 // pred_check
        %p96 = pneg %p29
      $region14: #{tpu_custom_call.1} parent=11 // pred_check_branch
        %98 = sbr.rel (%p96) target = $region16
      $region15: #{tpu_custom_call.1} parent=11 // pred_region
        _
      $region16: #{tpu_custom_call.1} parent=11 // pred_fallthru
        _
    $region12: #{tpu_custom_call.1} parent=5 // pred_fallthru
      _
    %p99 = scmp.lt.s32.totalorder %s8, 2
    // Predicated region
    $region17: #{tpu_custom_call.1} parent=5 // pred_check
      %p100 = pneg %p99
    $region18: #{tpu_custom_call.1} parent=5 // pred_check_branch
      %102 = sbr.rel (%p100) target = $region20
    $region19: #{tpu_custom_call.1} parent=5 // pred_region
      // Predicated region
      $region21: #{tpu_custom_call.1} parent=19 // pred_check
        %p103 = pneg %p49
      $region22: #{tpu_custom_call.1} parent=19 // pred_check_branch
        %105 = sbr.rel (%p103) target = $region24
      $region23: #{tpu_custom_call.1} parent=19 // pred_region
        %p106 = scmp.lt.s32.totalorder %s8, 1
        %s107 = scalar_select %p106, %s8, 1
        %s108 = smul.addr %s107, 6
        %s109 = smul.addr %s108, 8
        %s110 = scalar_lea.vmem %s1, %s109
      $region24: #{tpu_custom_call.1} parent=19 // pred_fallthru
        _
    $region20: #{tpu_custom_call.1} parent=5 // pred_fallthru
      _
    %p111 = scmp.le.s32.totalorder 1, %s8
    %p112 = scmp.lt.s32.totalorder %s8, 3
    %p113 = pnand %p111, %p112
    %p114 = pneg %p113
    // Predicated region
    $region25: #{tpu_custom_call.1} parent=5 // pred_check
      _
    $region26: #{tpu_custom_call.1} parent=5 // pred_check_branch
      %116 = sbr.rel (%p113) target = $region28
    $region27: #{tpu_custom_call.1} parent=5 // pred_region
      %s117 = ssub.s32 %s8, 1
      %p118 = pneg %p29
      %p119 = pneg %p26
      %p120 = scmp.lt.s32.totalorder %s13, 1
      %s121 = scalar_select %p120, %s13, 1
      %s122 = smul.addr %s121, 6
      %s123 = smul.addr %s122, 8
      %s124 = scalar_lea.vmem %s1, %s123
      %p125 = pneg %p55
      %p126 = pneg %p52
      %p127 = pneg %p81
      %p128 = pneg %p78
      %p129 = scmp.lt.s32.totalorder %s13, 1
      %s130 = scalar_select %p129, %s13, 1
      %s131 = smul.addr %s130, 96
      %s132 = smul.addr %s131, 8
      %s133 = scalar_lea.vmem %s2, %s132
      %p134 = scmp.lt.s32.totalorder %s13, 1
      %s135 = scalar_select %p134, %s13, 1
      %s136 = smul.addr %s135, 6
      %s137 = smul.addr %s136, 8
      %s138 = scalar_lea.vmem %s1, %s137
      %p139 = scmp.lt.s32.totalorder %s13, 1
      %s140 = scalar_select %p139, %s13, 1
      %s141 = smul.addr %s140, 96
      %s142 = smul.addr %s141, 8
      %s143 = scalar_lea.vmem %s2, %s142
      %v144 = vld [vmem:[%s138] sm:$0x7f]
      %v145 = vld [vmem:[%s138 + $0x8] sm:$0x7f]
      %v146 = vld [vmem:[%s138 + $0x10] sm:$0x7f]
      %v147 = vld [vmem:[%s138 + $0x18] sm:$0x7f]
      %v148 = vld [vmem:[%s138 + $0x20] sm:$0x7f]
      %v149 = vld [vmem:[%s138 + $0x28] sm:$0x7f]
      %v150 = vld [vmem:[%s0] sm:$0xf]
      %v151 = vmul.f32 %v144, 0.5
      %v152 = vmul.f32 %v145, 0.5
      %v153 = vtanh.pop %v151
      %v154 = vtanh.pop %v152
      %v155 = vmul.f32 %v153, 0.5
      %v156 = vmul.f32 %v154, 0.5
      %v157 = vadd.f32 %v155, 0.5
      %v158 = vadd.f32 %v156, 0.5
      %v161 = vunpack.c.l.s4 1983009808
      %v162 = vunpack.c.0.s8 %v161
      %v163 = vlaneseq
      %v164 = vshrl.u32 %v163, 7
      %v165 = vsub.s32 %v162, %v164
      %v166 = vrot.slane %v150, %v165
      %v167 = vcombine.high %v166, %v166
      %v170 = vadd.f32 %v157, %v166
      %v171 = vadd.f32 %v158, %v167
      %v172 = vmul.f32 %v170, 26.0
      %v173 = vmul.f32 %v171, 26.0
      %v174 = vmul.f32 %v144, 1.442695
      %v175 = vpow.pop %v174
      %v176 = vmul.f32 %v145, 1.442695
      %v177 = vpow.pop %v176
      %v178 = vmul.f32 %v175, 10.0
      %v179 = vmul.f32 %v177, 10.0
      %v180 = vmul.f32 %v175, 13.0
      %v181 = vmul.f32 %v177, 13.0
      %vm182 = vcmask 1041408
      %v183 = vsel %vm182, %v172, %v178
      %v184 = vsel %vm182, %v173, %v179
      %vm185 = vcmask 1042432
      %v186 = vsel %vm185, %v183, %v180
      %v187 = vsel %vm185, %v184, %v181
      %vm188 = vcmask 1043456
      %v189 = vsel %vm188, %v186, %v157
      %v190 = vsel %vm188, %v187, %v158
      %vm191 = vcmask 1046528
      %v192 = vsel %vm191, %v189, 0.0
      %v193 = vsel %vm191, %v190, 0.0
      %v194 = vmul.f32 %v146, 0.5
      %v195 = vmul.f32 %v147, 0.5
      %v196 = vtanh.pop %v194
      %v197 = vtanh.pop %v195
      %v198 = vmul.f32 %v196, 0.5
      %v199 = vmul.f32 %v197, 0.5
      %v200 = vadd.f32 %v198, 0.5
      %v201 = vadd.f32 %v199, 0.5
      %v202 = vadd.f32 %v200, %v166
      %v203 = vadd.f32 %v201, %v167
      %v204 = vmul.f32 %v202, 26.0
      %v205 = vmul.f32 %v203, 26.0
      %v206 = vmul.f32 %v146, 1.442695
      %v207 = vpow.pop %v206
      %v208 = vmul.f32 %v147, 1.442695
      %v209 = vpow.pop %v208
      %v210 = vmul.f32 %v207, 16.0
      %v211 = vmul.f32 %v209, 16.0
      %v212 = vmul.f32 %v207, 30.0
      %v213 = vmul.f32 %v209, 30.0
      %v214 = vsel %vm182, %v204, %v210
      %v215 = vsel %vm182, %v205, %v211
      %v216 = vsel %vm185, %v214, %v212
      %v217 = vsel %vm185, %v215, %v213
      %v218 = vsel %vm188, %v216, %v200
      %v219 = vsel %vm188, %v217, %v201
      %v220 = vsel %vm191, %v218, 0.0
      %v221 = vsel %vm191, %v219, 0.0
      %v222 = vmul.f32 %v148, 0.5
      %v223 = vmul.f32 %v149, 0.5
      %v224 = vtanh.pop %v222
      %v225 = vtanh.pop %v223
      %v226 = vmul.f32 %v224, 0.5
      %v227 = vmul.f32 %v225, 0.5
      %v228 = vadd.f32 %v226, 0.5
      %v229 = vadd.f32 %v227, 0.5
      %v230 = vadd.f32 %v228, %v166
      %v231 = vadd.f32 %v229, %v167
      %v232 = vmul.f32 %v230, 26.0
      %v233 = vmul.f32 %v231, 26.0
      %v234 = vmul.f32 %v148, 1.442695
      %v235 = vpow.pop %v234
      %v236 = vmul.f32 %v149, 1.442695
      %v237 = vpow.pop %v236
      %v238 = vmul.f32 %v235, 33.0
      %v239 = vmul.f32 %v237, 33.0
      %v240 = vmul.f32 %v235, 23.0
      %v241 = vmul.f32 %v237, 23.0
      %v242 = vsel %vm182, %v232, %v238
      %v243 = vsel %vm182, %v233, %v239
      %v244 = vsel %vm185, %v242, %v240
      %v245 = vsel %vm185, %v243, %v241
      %v246 = vsel %vm188, %v244, %v228
      %v247 = vsel %vm188, %v245, %v229
      %v248 = vsel %vm191, %v246, 0.0
      %v249 = vsel %vm191, %v247, 0.0
      %250 = vxpose.xlu0.b32.start [1/16] %v192, 128
      %251 = vxpose.xlu0.b32.cont [2/16] 0.0, 128
      %252 = vxpose.xlu0.b32.cont [3/16] 0.0, 128
      %253 = vxpose.xlu0.b32.cont [4/16] 0.0, 128
      %254 = vxpose.xlu0.b32.cont [5/16] 0.0, 128
      %255 = vxpose.xlu0.b32.cont [6/16] 0.0, 128
      %256 = vxpose.xlu0.b32.cont [7/16] 0.0, 128
      %257 = vxpose.xlu0.b32.cont [8/16] 0.0, 128
      %258 = vxpose.xlu0.b32.cont [9/16] 0.0, 128
      %259 = vxpose.xlu0.b32.cont [10/16] 0.0, 128
      %260 = vxpose.xlu0.b32.cont [11/16] 0.0, 128
      %261 = vxpose.xlu0.b32.cont [12/16] 0.0, 128
      %262 = vxpose.xlu0.b32.cont [13/16] 0.0, 128
      %263 = vxpose.xlu0.b32.cont [14/16] 0.0, 128
      %264 = vxpose.xlu0.b32.cont [15/16] 0.0, 128
      %265 = vxpose.xlu0.b32.end [16/16] 0.0, 128
      %v266 = vpop.trf.xlu0
      %v267 = vpop.trf.xlu0
      %v268 = vpop.trf.xlu0
      %v269 = vpop.trf.xlu0
      %v270 = vpop.trf.xlu0
      %v271 = vpop.trf.xlu0
      %v272 = vpop.trf.xlu0
      %v273 = vpop.trf.xlu0
      %v274 = vpop.trf.xlu0
      %v275 = vpop.trf.xlu0
      %v276 = vpop.trf.xlu0
      %v277 = vpop.trf.xlu0
      %v278 = vpop.trf.xlu0
      %v279 = vpop.trf.xlu0
      %v280 = vpop.trf.xlu0
      %v281 = vpop.trf.xlu0
      %282 = vxpose.xlu0.b32.start [1/16] %v193, 128
      %283 = vxpose.xlu0.b32.cont [2/16] 0.0, 128
      %284 = vxpose.xlu0.b32.cont [3/16] 0.0, 128
      %285 = vxpose.xlu0.b32.cont [4/16] 0.0, 128
      %286 = vxpose.xlu0.b32.cont [5/16] 0.0, 128
      %287 = vxpose.xlu0.b32.cont [6/16] 0.0, 128
      %288 = vxpose.xlu0.b32.cont [7/16] 0.0, 128
      %289 = vxpose.xlu0.b32.cont [8/16] 0.0, 128
      %290 = vxpose.xlu0.b32.cont [9/16] 0.0, 128
      %291 = vxpose.xlu0.b32.cont [10/16] 0.0, 128
      %292 = vxpose.xlu0.b32.cont [11/16] 0.0, 128
      %293 = vxpose.xlu0.b32.cont [12/16] 0.0, 128
      %294 = vxpose.xlu0.b32.cont [13/16] 0.0, 128
      %295 = vxpose.xlu0.b32.cont [14/16] 0.0, 128
      %296 = vxpose.xlu0.b32.cont [15/16] 0.0, 128
      %297 = vxpose.xlu0.b32.end [16/16] 0.0, 128
      %v298 = vpop.trf.xlu0
      %v299 = vpop.trf.xlu0
      %v300 = vpop.trf.xlu0
      %v301 = vpop.trf.xlu0
      %v302 = vpop.trf.xlu0
      %v303 = vpop.trf.xlu0
      %v304 = vpop.trf.xlu0
      %v305 = vpop.trf.xlu0
      %v306 = vpop.trf.xlu0
      %v307 = vpop.trf.xlu0
      %v308 = vpop.trf.xlu0
      %v309 = vpop.trf.xlu0
      %v310 = vpop.trf.xlu0
      %v311 = vpop.trf.xlu0
      %v312 = vpop.trf.xlu0
      %v313 = vpop.trf.xlu0
      %314 = vxpose.xlu0.b32.start [1/16] %v220, 128
      %315 = vxpose.xlu0.b32.cont [2/16] 0.0, 128
      %316 = vxpose.xlu0.b32.cont [3/16] 0.0, 128
      %317 = vxpose.xlu0.b32.cont [4/16] 0.0, 128
      %318 = vxpose.xlu0.b32.cont [5/16] 0.0, 128
      %319 = vxpose.xlu0.b32.cont [6/16] 0.0, 128
      %320 = vxpose.xlu0.b32.cont [7/16] 0.0, 128
      %321 = vxpose.xlu0.b32.cont [8/16] 0.0, 128
      %322 = vxpose.xlu0.b32.cont [9/16] 0.0, 128
      %323 = vxpose.xlu0.b32.cont [10/16] 0.0, 128
      %324 = vxpose.xlu0.b32.cont [11/16] 0.0, 128
      %325 = vxpose.xlu0.b32.cont [12/16] 0.0, 128
      %326 = vxpose.xlu0.b32.cont [13/16] 0.0, 128
      %327 = vxpose.xlu0.b32.cont [14/16] 0.0, 128
      %328 = vxpose.xlu0.b32.cont [15/16] 0.0, 128
      %329 = vxpose.xlu0.b32.end [16/16] 0.0, 128
      %v330 = vpop.trf.xlu0
      %v331 = vpop.trf.xlu0
      %v332 = vpop.trf.xlu0
      %v333 = vpop.trf.xlu0
      %v334 = vpop.trf.xlu0
      %v335 = vpop.trf.xlu0
      %v336 = vpop.trf.xlu0
      %v337 = vpop.trf.xlu0
      %v338 = vpop.trf.xlu0
      %v339 = vpop.trf.xlu0
      %v340 = vpop.trf.xlu0
      %v341 = vpop.trf.xlu0
      %v342 = vpop.trf.xlu0
      %v343 = vpop.trf.xlu0
      %v344 = vpop.trf.xlu0
      %v345 = vpop.trf.xlu0
      %346 = vxpose.xlu0.b32.start [1/16] %v221, 128
      %347 = vxpose.xlu0.b32.cont [2/16] 0.0, 128
      %348 = vxpose.xlu0.b32.cont [3/16] 0.0, 128
      %349 = vxpose.xlu0.b32.cont [4/16] 0.0, 128
      %350 = vxpose.xlu0.b32.cont [5/16] 0.0, 128
      %351 = vxpose.xlu0.b32.cont [6/16] 0.0, 128
      %352 = vxpose.xlu0.b32.cont [7/16] 0.0, 128
      %353 = vxpose.xlu0.b32.cont [8/16] 0.0, 128
      %354 = vxpose.xlu0.b32.cont [9/16] 0.0, 128
      %355 = vxpose.xlu0.b32.cont [10/16] 0.0, 128
      %356 = vxpose.xlu0.b32.cont [11/16] 0.0, 128
      %357 = vxpose.xlu0.b32.cont [12/16] 0.0, 128
      %358 = vxpose.xlu0.b32.cont [13/16] 0.0, 128
      %359 = vxpose.xlu0.b32.cont [14/16] 0.0, 128
      %360 = vxpose.xlu0.b32.cont [15/16] 0.0, 128
      %361 = vxpose.xlu0.b32.end [16/16] 0.0, 128
      %v362 = vpop.trf.xlu0
      %v363 = vpop.trf.xlu0
      %v364 = vpop.trf.xlu0
      %v365 = vpop.trf.xlu0
      %v366 = vpop.trf.xlu0
      %v367 = vpop.trf.xlu0
      %v368 = vpop.trf.xlu0
      %v369 = vpop.trf.xlu0
      %v370 = vpop.trf.xlu0
      %v371 = vpop.trf.xlu0
      %v372 = vpop.trf.xlu0
      %v373 = vpop.trf.xlu0
      %v374 = vpop.trf.xlu0
      %v375 = vpop.trf.xlu0
      %v376 = vpop.trf.xlu0
      %v377 = vpop.trf.xlu0
      %378 = vxpose.xlu0.b32.start [1/16] %v248, 128
      %379 = vxpose.xlu0.b32.cont [2/16] 0.0, 128
      %380 = vxpose.xlu0.b32.cont [3/16] 0.0, 128
      %381 = vxpose.xlu0.b32.cont [4/16] 0.0, 128
      %382 = vxpose.xlu0.b32.cont [5/16] 0.0, 128
      %383 = vxpose.xlu0.b32.cont [6/16] 0.0, 128
      %384 = vxpose.xlu0.b32.cont [7/16] 0.0, 128
      %385 = vxpose.xlu0.b32.cont [8/16] 0.0, 128
      %386 = vxpose.xlu0.b32.cont [9/16] 0.0, 128
      %387 = vxpose.xlu0.b32.cont [10/16] 0.0, 128
      %388 = vxpose.xlu0.b32.cont [11/16] 0.0, 128
      %389 = vxpose.xlu0.b32.cont [12/16] 0.0, 128
      %390 = vxpose.xlu0.b32.cont [13/16] 0.0, 128
      %391 = vxpose.xlu0.b32.cont [14/16] 0.0, 128
      %392 = vxpose.xlu0.b32.cont [15/16] 0.0, 128
      %393 = vxpose.xlu0.b32.end [16/16] 0.0, 128
      %v394 = vpop.trf.xlu0
      %v395 = vpop.trf.xlu0
      %v396 = vpop.trf.xlu0
      %v397 = vpop.trf.xlu0
      %v398 = vpop.trf.xlu0
      %v399 = vpop.trf.xlu0
      %v400 = vpop.trf.xlu0
      %v401 = vpop.trf.xlu0
      %v402 = vpop.trf.xlu0
      %v403 = vpop.trf.xlu0
      %v404 = vpop.trf.xlu0
      %v405 = vpop.trf.xlu0
      %v406 = vpop.trf.xlu0
      %v407 = vpop.trf.xlu0
      %v408 = vpop.trf.xlu0
      %v409 = vpop.trf.xlu0
      %410 = vxpose.xlu0.b32.start [1/16] %v249, 128
      %411 = vxpose.xlu0.b32.cont [2/16] 0.0, 128
      %412 = vxpose.xlu0.b32.cont [3/16] 0.0, 128
      %413 = vxpose.xlu0.b32.cont [4/16] 0.0, 128
      %414 = vxpose.xlu0.b32.cont [5/16] 0.0, 128
      %415 = vxpose.xlu0.b32.cont [6/16] 0.0, 128
      %416 = vxpose.xlu0.b32.cont [7/16] 0.0, 128
      %417 = vxpose.xlu0.b32.cont [8/16] 0.0, 128
      %418 = vxpose.xlu0.b32.cont [9/16] 0.0, 128
      %419 = vxpose.xlu0.b32.cont [10/16] 0.0, 128
      %420 = vxpose.xlu0.b32.cont [11/16] 0.0, 128
      %421 = vxpose.xlu0.b32.cont [12/16] 0.0, 128
      %422 = vxpose.xlu0.b32.cont [13/16] 0.0, 128
      %423 = vxpose.xlu0.b32.cont [14/16] 0.0, 128
      %424 = vxpose.xlu0.b32.cont [15/16] 0.0, 128
      %425 = vxpose.xlu0.b32.end [16/16] 0.0, 128
      %v426 = vpop.trf.xlu0
      %v427 = vpop.trf.xlu0
      %v428 = vpop.trf.xlu0
      %v429 = vpop.trf.xlu0
      %v430 = vpop.trf.xlu0
      %v431 = vpop.trf.xlu0
      %v432 = vpop.trf.xlu0
      %v433 = vpop.trf.xlu0
      %v434 = vpop.trf.xlu0
      %v435 = vpop.trf.xlu0
      %v436 = vpop.trf.xlu0
      %v437 = vpop.trf.xlu0
      %v438 = vpop.trf.xlu0
      %v439 = vpop.trf.xlu0
      %v440 = vpop.trf.xlu0
      %v441 = vpop.trf.xlu0
      %vm442 = vcmask 56320
      %443 = vst.msk [vmem:[%s143] sm:$0xff] %vm442, %v266
      %444 = vst.msk [vmem:[%s143 + $0x8] sm:$0xff] %vm442, %v267
      %445 = vst.msk [vmem:[%s143 + $0x10] sm:$0xff] %vm442, %v268
      %446 = vst.msk [vmem:[%s143 + $0x18] sm:$0xff] %vm442, %v269
      %447 = vst.msk [vmem:[%s143 + $0x20] sm:$0xff] %vm442, %v270
      %448 = vst.msk [vmem:[%s143 + $0x28] sm:$0xff] %vm442, %v271
      %449 = vst.msk [vmem:[%s143 + $0x30] sm:$0xff] %vm442, %v272
      %450 = vst.msk [vmem:[%s143 + $0x38] sm:$0xff] %vm442, %v273
      %451 = vst.msk [vmem:[%s143 + $0x40] sm:$0xff] %vm442, %v274
      %452 = vst.msk [vmem:[%s143 + $0x48] sm:$0xff] %vm442, %v275
      %453 = vst.msk [vmem:[%s143 + $0x50] sm:$0xff] %vm442, %v276
      %454 = vst.msk [vmem:[%s143 + $0x58] sm:$0xff] %vm442, %v277
      %455 = vst.msk [vmem:[%s143 + $0x60] sm:$0xff] %vm442, %v278
      %456 = vst.msk [vmem:[%s143 + $0x68] sm:$0xff] %vm442, %v279
      %457 = vst.msk [vmem:[%s143 + $0x70] sm:$0xff] %vm442, %v280
      %458 = vst.msk [vmem:[%s143 + $0x78] sm:$0xff] %vm442, %v281
      %459 = vst.msk [vmem:[%s143 + $0x80] sm:$0xff] %vm442, %v298
      %460 = vst.msk [vmem:[%s143 + $0x88] sm:$0xff] %vm442, %v299
      %461 = vst.msk [vmem:[%s143 + $0x90] sm:$0xff] %vm442, %v300
      %462 = vst.msk [vmem:[%s143 + $0x98] sm:$0xff] %vm442, %v301
      %463 = vst.msk [vmem:[%s143 + $0xa0] sm:$0xff] %vm442, %v302
      %464 = vst.msk [vmem:[%s143 + $0xa8] sm:$0xff] %vm442, %v303
      %465 = vst.msk [vmem:[%s143 + $0xb0] sm:$0xff] %vm442, %v304
      %466 = vst.msk [vmem:[%s143 + $0xb8] sm:$0xff] %vm442, %v305
      %467 = vst.msk [vmem:[%s143 + $0xc0] sm:$0xff] %vm442, %v306
      %468 = vst.msk [vmem:[%s143 + $0xc8] sm:$0xff] %vm442, %v307
      %469 = vst.msk [vmem:[%s143 + $0xd0] sm:$0xff] %vm442, %v308
      %470 = vst.msk [vmem:[%s143 + $0xd8] sm:$0xff] %vm442, %v309
      %471 = vst.msk [vmem:[%s143 + $0xe0] sm:$0xff] %vm442, %v310
      %472 = vst.msk [vmem:[%s143 + $0xe8] sm:$0xff] %vm442, %v311
      %473 = vst.msk [vmem:[%s143 + $0xf0] sm:$0xff] %vm442, %v312
      %474 = vst.msk [vmem:[%s143 + $0xf8] sm:$0xff] %vm442, %v313
      %475 = vst.msk [vmem:[%s143 + $0x100] sm:$0xff] %vm442, %v330
      %476 = vst.msk [vmem:[%s143 + $0x108] sm:$0xff] %vm442, %v331
      %477 = vst.msk [vmem:[%s143 + $0x110] sm:$0xff] %vm442, %v332
      %478 = vst.msk [vmem:[%s143 + $0x118] sm:$0xff] %vm442, %v333
      %479 = vst.msk [vmem:[%s143 + $0x120] sm:$0xff] %vm442, %v334
      %480 = vst.msk [vmem:[%s143 + $0x128] sm:$0xff] %vm442, %v335
      %481 = vst.msk [vmem:[%s143 + $0x130] sm:$0xff] %vm442, %v336
      %482 = vst.msk [vmem:[%s143 + $0x138] sm:$0xff] %vm442, %v337
      %483 = vst.msk [vmem:[%s143 + $0x140] sm:$0xff] %vm442, %v338
      %484 = vst.msk [vmem:[%s143 + $0x148] sm:$0xff] %vm442, %v339
      %485 = vst.msk [vmem:[%s143 + $0x150] sm:$0xff] %vm442, %v340
      %486 = vst.msk [vmem:[%s143 + $0x158] sm:$0xff] %vm442, %v341
      %487 = vst.msk [vmem:[%s143 + $0x160] sm:$0xff] %vm442, %v342
      %488 = vst.msk [vmem:[%s143 + $0x168] sm:$0xff] %vm442, %v343
      %489 = vst.msk [vmem:[%s143 + $0x170] sm:$0xff] %vm442, %v344
      %490 = vst.msk [vmem:[%s143 + $0x178] sm:$0xff] %vm442, %v345
      %491 = vst.msk [vmem:[%s143 + $0x180] sm:$0xff] %vm442, %v362
      %492 = vst.msk [vmem:[%s143 + $0x188] sm:$0xff] %vm442, %v363
      %493 = vst.msk [vmem:[%s143 + $0x190] sm:$0xff] %vm442, %v364
      %494 = vst.msk [vmem:[%s143 + $0x198] sm:$0xff] %vm442, %v365
      %495 = vst.msk [vmem:[%s143 + $0x1a0] sm:$0xff] %vm442, %v366
      %496 = vst.msk [vmem:[%s143 + $0x1a8] sm:$0xff] %vm442, %v367
      %497 = vst.msk [vmem:[%s143 + $0x1b0] sm:$0xff] %vm442, %v368
      %498 = vst.msk [vmem:[%s143 + $0x1b8] sm:$0xff] %vm442, %v369
      %499 = vst.msk [vmem:[%s143 + $0x1c0] sm:$0xff] %vm442, %v370
      %500 = vst.msk [vmem:[%s143 + $0x1c8] sm:$0xff] %vm442, %v371
      %501 = vst.msk [vmem:[%s143 + $0x1d0] sm:$0xff] %vm442, %v372
      %502 = vst.msk [vmem:[%s143 + $0x1d8] sm:$0xff] %vm442, %v373
      %503 = vst.msk [vmem:[%s143 + $0x1e0] sm:$0xff] %vm442, %v374
      %504 = vst.msk [vmem:[%s143 + $0x1e8] sm:$0xff] %vm442, %v375
      %505 = vst.msk [vmem:[%s143 + $0x1f0] sm:$0xff] %vm442, %v376
      %506 = vst.msk [vmem:[%s143 + $0x1f8] sm:$0xff] %vm442, %v377
      %507 = vst.msk [vmem:[%s143 + $0x200] sm:$0xff] %vm442, %v394
      %508 = vst.msk [vmem:[%s143 + $0x208] sm:$0xff] %vm442, %v395
      %509 = vst.msk [vmem:[%s143 + $0x210] sm:$0xff] %vm442, %v396
      %510 = vst.msk [vmem:[%s143 + $0x218] sm:$0xff] %vm442, %v397
      %511 = vst.msk [vmem:[%s143 + $0x220] sm:$0xff] %vm442, %v398
      %512 = vst.msk [vmem:[%s143 + $0x228] sm:$0xff] %vm442, %v399
      %513 = vst.msk [vmem:[%s143 + $0x230] sm:$0xff] %vm442, %v400
      %514 = vst.msk [vmem:[%s143 + $0x238] sm:$0xff] %vm442, %v401
      %515 = vst.msk [vmem:[%s143 + $0x240] sm:$0xff] %vm442, %v402
      %516 = vst.msk [vmem:[%s143 + $0x248] sm:$0xff] %vm442, %v403
      %517 = vst.msk [vmem:[%s143 + $0x250] sm:$0xff] %vm442, %v404
      %518 = vst.msk [vmem:[%s143 + $0x258] sm:$0xff] %vm442, %v405
      %519 = vst.msk [vmem:[%s143 + $0x260] sm:$0xff] %vm442, %v406
      %520 = vst.msk [vmem:[%s143 + $0x268] sm:$0xff] %vm442, %v407
      %521 = vst.msk [vmem:[%s143 + $0x270] sm:$0xff] %vm442, %v408
      %522 = vst.msk [vmem:[%s143 + $0x278] sm:$0xff] %vm442, %v409
      %523 = vst.msk [vmem:[%s143 + $0x280] sm:$0xff] %vm442, %v426
      %524 = vst.msk [vmem:[%s143 + $0x288] sm:$0xff] %vm442, %v427
      %525 = vst.msk [vmem:[%s143 + $0x290] sm:$0xff] %vm442, %v428
      %526 = vst.msk [vmem:[%s143 + $0x298] sm:$0xff] %vm442, %v429
      %527 = vst.msk [vmem:[%s143 + $0x2a0] sm:$0xff] %vm442, %v430
      %528 = vst.msk [vmem:[%s143 + $0x2a8] sm:$0xff] %vm442, %v431
      %529 = vst.msk [vmem:[%s143 + $0x2b0] sm:$0xff] %vm442, %v432
      %530 = vst.msk [vmem:[%s143 + $0x2b8] sm:$0xff] %vm442, %v433
      %531 = vst.msk [vmem:[%s143 + $0x2c0] sm:$0xff] %vm442, %v434
      %532 = vst.msk [vmem:[%s143 + $0x2c8] sm:$0xff] %vm442, %v435
      %533 = vst.msk [vmem:[%s143 + $0x2d0] sm:$0xff] %vm442, %v436
      %534 = vst.msk [vmem:[%s143 + $0x2d8] sm:$0xff] %vm442, %v437
      %535 = vst.msk [vmem:[%s143 + $0x2e0] sm:$0xff] %vm442, %v438
      %536 = vst.msk [vmem:[%s143 + $0x2e8] sm:$0xff] %vm442, %v439
      %537 = vst.msk [vmem:[%s143 + $0x2f0] sm:$0xff] %vm442, %v440
      %538 = vst.msk [vmem:[%s143 + $0x2f8] sm:$0xff] %vm442, %v441
      %p539 = scmp.lt.s32.totalorder %s13, 1
      %s540 = scalar_select %p539, %s13, 1
      %s541 = smul.addr %s540, 96
      %s542 = smul.addr %s541, 8
      %s543 = scalar_lea.vmem %s2, %s542
      // Predicated region
      $region29: #{tpu_custom_call.1} parent=27 // pred_check
        %p544 = pneg %p78
      $region30: #{tpu_custom_call.1} parent=27 // pred_check_branch
        %546 = sbr.rel (%p544) target = $region32
      $region31: #{tpu_custom_call.1} parent=27 // pred_region
        _
      $region32: #{tpu_custom_call.1} parent=27 // pred_fallthru
        _
    $region28: #{tpu_custom_call.1} parent=5 // pred_fallthru
      _
    %p547 = scmp.le.s32.totalorder 2, %s8
    // Predicated region
    $region33: #{tpu_custom_call.1} parent=5 // pred_check
      %p548 = pneg %p547
    $region34: #{tpu_custom_call.1} parent=5 // pred_check_branch
      %550 = sbr.rel (%p548) target = $region36
    $region35: #{tpu_custom_call.1} parent=5 // pred_region
      %s551 = ssub.s32 %s8, 2
      // Predicated region
      $region37: #{tpu_custom_call.1} parent=35 // pred_check
        %p552 = pneg %p84
      $region38: #{tpu_custom_call.1} parent=35 // pred_check_branch
        %554 = sbr.rel (%p552) target = $region40
      $region39: #{tpu_custom_call.1} parent=35 // pred_region
        %p555 = scmp.lt.s32.totalorder %s14, 1
        %s556 = scalar_select %p555, %s14, 1
        %s557 = smul.addr %s556, 96
        %s558 = smul.addr %s557, 8
        %s559 = scalar_lea.vmem %s2, %s558
      $region40: #{tpu_custom_call.1} parent=35 // pred_fallthru
        _
    $region36: #{tpu_custom_call.1} parent=5 // pred_fallthru
      _
  $region6: #{tpu_custom_call.1} parent=0 // loop_footer
    %s12 = sadd.s32 1, %s8
  $region7: #{tpu_custom_call.1} parent=0 // loop_footer_branch
    %7 = sbr.rel target = $region3
  $region8: #{tpu_custom_call.1} parent=0 // loop_exit
    _

</llo_original>
